<compile_context>
chip_gen: v7x
topology: tpu7x:2x2x1
jax: 0.10.0
libtpu: 0.0.40
codegen_flags: <defaults>
</compile_context>

<pallas_src>
import functools

import jax
import jax.numpy as jnp
from jax.experimental import pallas as pl
from jax.experimental.pallas import tpu as pltpu


# ----------------------------- helpers --------------------------------------

def _round_up(x, m):
    return ((x + m - 1) // m) * m


# ----------------------------- Pallas kernel --------------------------------

def _imder_head_kernel(x_ref, w_ref, o_ref):
    # x_ref: (B_pad, D_pad) bf16 dummy activations, bias column folded in
    #        (constant 1 at column D, zeros beyond).
    # w_ref: (D_pad, O_pad) bf16 weight with the bias folded in as row D.
    # o_ref: (B_pad, O_pad) f32 output.
    o_ref[...] = jnp.dot(x_ref[...], w_ref[...],
                         preferred_element_type=jnp.float32)


def imder_head(x_pad_bf16, w_pad_bf16):
    """Fused linear head on padded, bias-folded operands -> (B_pad, O_pad) f32."""
    b_pad, d_pad = x_pad_bf16.shape
    _, o_pad = w_pad_bf16.shape
    cost = pl.CostEstimate(
        flops=2 * b_pad * d_pad * o_pad,
        transcendentals=0,
        bytes_accessed=(x_pad_bf16.size * 2      # bf16 activations
                        + w_pad_bf16.size * 2    # bf16 weight (bias folded)
                        + b_pad * o_pad * 4))    # f32 output
    return pl.pallas_call(
        _imder_head_kernel,
        out_shape=jax.ShapeDtypeStruct((b_pad, o_pad), jnp.float32),
        in_specs=[
            pl.BlockSpec(memory_space=pltpu.MemorySpace.VMEM),   # activations
            pl.BlockSpec(memory_space=pltpu.MemorySpace.VMEM),   # weight+bias
        ],
        out_specs=pl.BlockSpec(memory_space=pltpu.MemorySpace.VMEM),
        cost_estimate=cost,
    )(x_pad_bf16, w_pad_bf16)


# ----------------------------- jitted forward --------------------------------

@functools.partial(
    jax.jit,
    static_argnames=("batch", "batch_pad", "noise_dim", "in_dim_pad", "out_dim"))
def _imder_forward(seed, w_pad_bf16, *, batch, batch_pad, noise_dim,
                   in_dim_pad, out_dim):
    # Dummy activations matching torch.randn semantics (standard normal).
    key = jax.random.fold_in(jax.random.PRNGKey(0), seed)
    noise = jax.random.normal(key, (batch_pad, noise_dim), jnp.float32)
    # Fold the bias: constant-1 column at index `noise_dim`, zeros beyond
    # (keeps D a multiple of 8 sublanes: 384 -> 392).
    pad = jnp.zeros((batch_pad, in_dim_pad - noise_dim), jnp.float32)
    pad = pad.at[:, 0].set(1.0)
    x = jnp.concatenate([noise, pad], axis=1).astype(jnp.bfloat16)
    y_pad = imder_head(x, w_pad_bf16)
    return y_pad[:batch, :out_dim]


# ----------------------------- IMDER module ----------------------------------

class IMDERPallas:
    """JAX/Pallas re-implementation of the IMDER forward pass."""

    def __init__(self, key, dst_feature_dim=64, num_classes=10):
        self.d_l = self.d_a = self.d_v = dst_feature_dim
        combined_dim = 2 * (self.d_l + self.d_a + self.d_v)    # 384 (see TODO)
        self.noise_dim = combined_dim
        self.output_dim = num_classes
        self.padded_output_dim = _round_up(num_classes, 128)   # 128: lane-dense
        self.padded_in_dim = _round_up(combined_dim + 1, 8)    # 392: bias row + pad

        k_w, k_b = jax.random.split(key)
        # Deterministic init mimicking nn.Linear default (uniform +-1/sqrt(fan_in)).
        bound = 1.0 / jnp.sqrt(jnp.float32(combined_dim))
        w = jax.random.uniform(
            k_w, (combined_dim, num_classes), jnp.float32, -bound, bound)
        b = jax.random.uniform(
            k_b, (num_classes,), jnp.float32, -bound, bound)
        self.w = w
        self.b = b

        # Padded weight: rows 0..383 = W, row 384 = bias, rows 385..391 = 0;
        # columns 10..127 = 0 so padded lanes never leak garbage.
        w_pad = jnp.zeros((self.padded_in_dim, self.padded_output_dim), jnp.float32)
        w_pad = w_pad.at[:combined_dim, :num_classes].set(w)
        w_pad = w_pad.at[combined_dim, :num_classes].set(b)
        # bf16: single-pass MXU + half the DMA bytes; f32 accumulation in-kernel.
        self.w_pad_bf16 = w_pad.astype(jnp.bfloat16)

    def forward(self, text, audio, video, seed, num_modal=None):
        batch = text.shape[0]
        batch_pad = _round_up(max(batch, 8), 8)                 # full sublanes
        return _imder_forward(
            seed, self.w_pad_bf16,
            batch=batch, batch_pad=batch_pad,
            noise_dim=self.noise_dim, in_dim_pad=self.padded_in_dim,
            out_dim=self.output_dim)


# --------------------------------- main ---------------------------------------

if __name__ == "__main__":
    root = jax.random.PRNGKey(0)
    k_init, k_text, k_audio, k_video = jax.random.split(root, 4)

    batch = 4
    seq = 8
    # feature_dims = (768, 128, 128) per Args; inputs only supply batch_size.
    text = jax.random.normal(k_text, (batch, seq, 768), jnp.float32)
    audio = jax.random.normal(k_audio, (batch, seq, 128), jnp.float32)
    video = jax.random.normal(k_video, (batch, seq, 128), jnp.float32)

    model = IMDERPallas(k_init, dst_feature_dim=64, num_classes=10)
    seed = jnp.int32(1234)   # pre-placed device scalar: no per-call host transfer
    out = jax.block_until_ready(model.forward(text, audio, video, seed))
    assert out.shape == (batch, model.output_dim)

    # Cross-check: rebuild the identical bias-folded, bf16-rounded operands and
    # compare the kernel output against a plain-JAX matmul.
    batch_pad = _round_up(max(batch, 8), 8)
    key = jax.random.fold_in(jax.random.PRNGKey(0), seed)
    noise = jax.random.normal(key, (batch_pad, model.noise_dim), jnp.float32)
    pad = jnp.zeros((batch_pad, model.padded_in_dim - model.noise_dim), jnp.float32)
    pad = pad.at[:, 0].set(1.0)
    x_ref = jnp.concatenate([noise, pad], axis=1).astype(jnp.bfloat16).astype(jnp.float32)
    w_ref = model.w_pad_bf16.astype(jnp.float32)
    ref_full = jnp.dot(x_ref, w_ref, precision=jax.lax.Precision.HIGHEST)
    ref = ref_full[:batch, :model.output_dim]

    assert bool(jnp.all(jnp.isfinite(out)))
    assert jnp.allclose(out, ref, atol=1e-2, rtol=1e-2), (
        float(jnp.max(jnp.abs(out - ref))))

    print("KERNEL_OK")
</pallas_src>

<mosaic_0001>
module attributes {stable_mosaic.version = 11 : i64} {
  func.func @_imder_head_kernel(%arg0: memref<8x392xbf16, #tpu.memory_space<vmem>>, %arg1: memref<392x128xbf16, #tpu.memory_space<vmem>>, %arg2: memref<8x128xf32, #tpu.memory_space<vmem>>) attributes {dimension_semantics = [], scalar_prefetch = 0 : i64, scratch_operands = 0 : i64, tpu.core_type = #tpu.core_type<tc>} {
    %c0 = arith.constant 0 : index
    %c0_0 = arith.constant 0 : index
    %0 = vector.load %arg0[%c0, %c0_0] : memref<8x392xbf16, #tpu.memory_space<vmem>>, vector<8x392xbf16>
    %c0_1 = arith.constant 0 : index
    %c0_2 = arith.constant 0 : index
    %1 = vector.load %arg1[%c0_1, %c0_2] : memref<392x128xbf16, #tpu.memory_space<vmem>>, vector<392x128xbf16>
    %cst = arith.constant dense<0.000000e+00> : vector<8x128xf32>
    %2 = tpu.matmul %0, %1, %cst {dimension_numbers = #tpu.dot_dimension_numbers<[1], [0], [0], [1], [0, 0, 1, 1], [], []>} : vector<8x392xbf16>, vector<392x128xbf16>, vector<8x128xf32> -> vector<8x128xf32>
    %c0_3 = arith.constant 0 : index
    %c0_4 = arith.constant 0 : index
    %3 = vector.load %arg2[%c0_3, %c0_4] : memref<8x128xf32, #tpu.memory_space<vmem>>, vector<8x128xf32>
    tpu.vector_store %arg2[%c0_3, %c0_4], %2 {strides = array<i32>} : memref<8x128xf32, #tpu.memory_space<vmem>>, vector<8x128xf32>,
    return
  }
}

</mosaic_0001>

<llo_original>
// kernel: _imder_forward.3
$region0: #{_imder_forward.3}
  #allocation0 [shape = 'u32[]', space=smem, size = 0x4, offset = 0x4, fixed_abs, tag = 'smem constant byte address 0x4 - core index']
  #allocation1 [shape = 'u32[144,128]{1,0:T(1,128)}', space=vmem, size = 0x12000, scoped, tag = 'internal scratch']
  %s0 = inlined_call_operand.vmem [shape: bf16[8,392], index: 0, kind: input, shape index: {}]
  %s1 = inlined_call_operand.vmem [shape: bf16[392,128], index: 1, kind: input, shape index: {}]
  %s2 = inlined_call_operand.vmem [shape: f32[8,128], index: 2, kind: output, shape index: {}]
  %s3 = sld [smem:[#allocation0]]
  $region18: #{_imder_forward.3} parent=0
    _
  %s5 = ssub.s32 1, %s3
  %s6 = scalar_select 0, %s5, %s3
  // Predicated region
  $region2: #{_imder_forward.3} parent=0 // pred_check
    _
  $region3: #{_imder_forward.3} parent=0 // pred_check_branch
    %8 = sbr.rel (0) target = $region5
  $region4: #{_imder_forward.3} parent=0 // pred_region
    _
  $region5: #{_imder_forward.3} parent=0 // pred_fallthru
    _
  // Predicated region
  $region6: #{_imder_forward.3} parent=0 // pred_check
    _
  $region7: #{_imder_forward.3} parent=0 // pred_check_branch
    %10 = sbr.rel (0) target = $region9
  $region8: #{_imder_forward.3} parent=0 // pred_region
    _
  $region9: #{_imder_forward.3} parent=0 // pred_fallthru
    _
  %v12 = vld [vmem:[%s0] sm:$0xff]
  %v13 = vld [vmem:[%s0 + $0x8] sm:$0xff]
  %v14 = vld [vmem:[%s1] sm:$0xf]
  %v15 = vld [vmem:[%s1 + $0x4] sm:$0xf]
  %v16 = vld [vmem:[%s1 + $0x8] sm:$0xf]
  %v17 = vld [vmem:[%s1 + $0xc] sm:$0xf]
  %v18 = vld [vmem:[%s1 + $0x10] sm:$0xf]
  %v19 = vld [vmem:[%s1 + $0x14] sm:$0xf]
  %v20 = vld [vmem:[%s1 + $0x18] sm:$0xf]
  %v21 = vld [vmem:[%s1 + $0x1c] sm:$0xf]
  %v22 = vld [vmem:[%s1 + $0x20] sm:$0xf]
  %v23 = vld [vmem:[%s1 + $0x24] sm:$0xf]
  %v24 = vld [vmem:[%s1 + $0x28] sm:$0xf]
  %v25 = vld [vmem:[%s1 + $0x2c] sm:$0xf]
  %v26 = vld [vmem:[%s1 + $0x30] sm:$0xf]
  %v27 = vld [vmem:[%s1 + $0x34] sm:$0xf]
  %v28 = vld [vmem:[%s1 + $0x38] sm:$0xf]
  %v29 = vld [vmem:[%s1 + $0x3c] sm:$0xf]
  %v30 = vld [vmem:[%s1 + $0x40] sm:$0xf]
  %v31 = vld [vmem:[%s1 + $0x44] sm:$0xf]
  %v32 = vld [vmem:[%s1 + $0x48] sm:$0xf]
  %v33 = vld [vmem:[%s1 + $0x4c] sm:$0xf]
  %v34 = vld [vmem:[%s1 + $0x50] sm:$0xf]
  %v35 = vld [vmem:[%s1 + $0x54] sm:$0xf]
  %v36 = vld [vmem:[%s1 + $0x58] sm:$0xf]
  %v37 = vld [vmem:[%s1 + $0x5c] sm:$0xf]
  %v38 = vld [vmem:[%s1 + $0x60] sm:$0xf]
  %v39 = vld [vmem:[%s1 + $0x64] sm:$0xf]
  %v40 = vld [vmem:[%s1 + $0x68] sm:$0xf]
  %v41 = vld [vmem:[%s1 + $0x6c] sm:$0xf]
  %v42 = vld [vmem:[%s1 + $0x70] sm:$0xf]
  %v43 = vld [vmem:[%s1 + $0x74] sm:$0xf]
  %v44 = vld [vmem:[%s1 + $0x78] sm:$0xf]
  %v45 = vld [vmem:[%s1 + $0x7c] sm:$0xf]
  %v46 = vld [vmem:[%s1 + $0x80] sm:$0xf]
  %v47 = vld [vmem:[%s1 + $0x84] sm:$0xf]
  %v48 = vld [vmem:[%s1 + $0x88] sm:$0xf]
  %v49 = vld [vmem:[%s1 + $0x8c] sm:$0xf]
  %v50 = vld [vmem:[%s1 + $0x90] sm:$0xf]
  %v51 = vld [vmem:[%s1 + $0x94] sm:$0xf]
  %v52 = vld [vmem:[%s1 + $0x98] sm:$0xf]
  %v53 = vld [vmem:[%s1 + $0x9c] sm:$0xf]
  %v54 = vld [vmem:[%s1 + $0xa0] sm:$0xf]
  %v55 = vld [vmem:[%s1 + $0xa4] sm:$0xf]
  %v56 = vld [vmem:[%s1 + $0xa8] sm:$0xf]
  %v57 = vld [vmem:[%s1 + $0xac] sm:$0xf]
  %v58 = vld [vmem:[%s1 + $0xb0] sm:$0xf]
  %v59 = vld [vmem:[%s1 + $0xb4] sm:$0xf]
  %v60 = vld [vmem:[%s1 + $0xb8] sm:$0xf]
  %v61 = vld [vmem:[%s1 + $0xbc] sm:$0xf]
  %v62 = vld [vmem:[%s1 + $0xc0] sm:$0xf]
  %v65 = vunpack.c.l.b16 %v12
  %v66 = vunpack.c.h.b16 %v12
  %v67 = vunpack.c.l.b16 %v13
  %v68 = vunpack.c.h.b16 %v13
  %v69 = vpack.c.b16 %v65, %v65
  %v70 = vpack.c.b16 %v66, %v66
  %v71 = vpack.c.b16 %v67, %v67
  %v72 = vpack.c.b16 %v68, %v68
  %v125 = vunpack.c.l.b16 %v14
  %v126 = vunpack.c.l.b16 %v15
  %v127 = vunpack.c.l.b16 %v16
  %v128 = vunpack.c.l.b16 %v17
  %v129 = vunpack.c.l.b16 %v18
  %v130 = vunpack.c.l.b16 %v19
  %v131 = vunpack.c.l.b16 %v20
  %v132 = vunpack.c.l.b16 %v21
  %v133 = vunpack.c.l.b16 %v22
  %v134 = vunpack.c.l.b16 %v23
  %v135 = vunpack.c.l.b16 %v24
  %v136 = vunpack.c.l.b16 %v25
  %v137 = vunpack.c.l.b16 %v26
  %v138 = vunpack.c.l.b16 %v27
  %v139 = vunpack.c.l.b16 %v28
  %v140 = vunpack.c.l.b16 %v29
  %v141 = vunpack.c.l.b16 %v30
  %v142 = vunpack.c.l.b16 %v31
  %v143 = vunpack.c.l.b16 %v32
  %v144 = vunpack.c.l.b16 %v33
  %v145 = vunpack.c.l.b16 %v34
  %v146 = vunpack.c.l.b16 %v35
  %v147 = vunpack.c.l.b16 %v36
  %v148 = vunpack.c.l.b16 %v37
  %v149 = vunpack.c.l.b16 %v38
  %v150 = vunpack.c.l.b16 %v39
  %v151 = vunpack.c.l.b16 %v40
  %v152 = vunpack.c.l.b16 %v41
  %v153 = vunpack.c.l.b16 %v42
  %v154 = vunpack.c.l.b16 %v43
  %v155 = vunpack.c.l.b16 %v44
  %v156 = vunpack.c.l.b16 %v45
  %v157 = vunpack.c.l.b16 %v46
  %v158 = vunpack.c.l.b16 %v47
  %v159 = vunpack.c.l.b16 %v48
  %v160 = vunpack.c.l.b16 %v49
  %v161 = vunpack.c.l.b16 %v50
  %v162 = vunpack.c.l.b16 %v51
  %v163 = vunpack.c.l.b16 %v52
  %v164 = vunpack.c.l.b16 %v53
  %v165 = vunpack.c.l.b16 %v54
  %v166 = vunpack.c.l.b16 %v55
  %v167 = vunpack.c.l.b16 %v56
  %v168 = vunpack.c.l.b16 %v57
  %v169 = vunpack.c.l.b16 %v58
  %v170 = vunpack.c.l.b16 %v59
  %v171 = vunpack.c.l.b16 %v60
  %v172 = vunpack.c.l.b16 %v61
  %v173 = vunpack.c.l.b16 %v62
  %v174 = vpack.c.b16 %v126, %v125
  %v175 = vpack.c.b16 %v128, %v127
  %v176 = vpack.c.b16 %v130, %v129
  %v177 = vpack.c.b16 %v132, %v131
  %v178 = vpack.c.b16 %v134, %v133
  %v179 = vpack.c.b16 %v136, %v135
  %v180 = vpack.c.b16 %v138, %v137
  %v181 = vpack.c.b16 %v140, %v139
  %v182 = vpack.c.b16 %v142, %v141
  %v183 = vpack.c.b16 %v144, %v143
  %v184 = vpack.c.b16 %v146, %v145
  %v185 = vpack.c.b16 %v148, %v147
  %v186 = vpack.c.b16 %v150, %v149
  %v187 = vpack.c.b16 %v152, %v151
  %v188 = vpack.c.b16 %v154, %v153
  %v189 = vpack.c.b16 %v156, %v155
  %v190 = vpack.c.b16 %v158, %v157
  %v191 = vpack.c.b16 %v160, %v159
  %v192 = vpack.c.b16 %v162, %v161
  %v193 = vpack.c.b16 %v164, %v163
  %v194 = vpack.c.b16 %v166, %v165
  %v195 = vpack.c.b16 %v168, %v167
  %v196 = vpack.c.b16 %v170, %v169
  %v197 = vpack.c.b16 %v172, %v171
  %v198 = vpack.c.b16 %v173, %v173
  %vm223 = vcmask 64512
  %v225 = vsel %vm223, %v72, 0
  %vm227 = vcmask 1043456
  %v229 = vsel %vm227, %v198, 0
  %231 = vmatprep.subr.bf16.mxu0 0
  %232 = vmatpush1.bf16.msra.mxu0 %v174
  %233 = vmatprep.subr.bf16.mxu0 0
  %234 = vmatpush1.bf16.msra.mxu0 %v175
  %235 = vmatprep.subr.bf16.mxu0 0
  %236 = vmatpush1.bf16.msra.mxu0 %v176
  %237 = vmatprep.subr.bf16.mxu0 0
  %238 = vmatpush1.bf16.msra.mxu0 %v177
  %239 = vmatprep.subr.bf16.mxu0 0
  %240 = vmatpush1.bf16.msra.mxu0 %v178
  %241 = vmatprep.subr.bf16.mxu0 0
  %242 = vmatpush1.bf16.msra.mxu0 %v179
  %243 = vmatprep.subr.bf16.mxu0 0
  %244 = vmatpush1.bf16.msra.mxu0 %v180
  %245 = vmatprep.subr.bf16.mxu0 0
  %246 = vmatpush1.bf16.msra.mxu0 %v181
  %247 = vmatprep.subr.bf16.mxu0 0
  %248 = vmatpush1.bf16.msra.mxu0 %v182
  %249 = vmatprep.subr.bf16.mxu0 0
  %250 = vmatpush1.bf16.msra.mxu0 %v183
  %251 = vmatprep.subr.bf16.mxu0 0
  %252 = vmatpush1.bf16.msra.mxu0 %v184
  %253 = vmatprep.subr.bf16.mxu0 0
  %254 = vmatpush1.bf16.msra.mxu0 %v185
  %255 = vmatprep.subr.bf16.mxu0 0
  %256 = vmatpush1.bf16.msra.mxu0 %v186
  %257 = vmatprep.subr.bf16.mxu0 0
  %258 = vmatpush1.bf16.msra.mxu0 %v187
  %259 = vmatprep.subr.bf16.mxu0 0
  %260 = vmatpush1.bf16.msra.mxu0 %v188
  %261 = vmatprep.subr.bf16.mxu0 0
  %262 = vmatpush1.bf16.msra.mxu0 %v189
  %263 = vmatprep.mubr.bf16.mxu0 %v70
  %264 = vmatmul.mubr.bf16.gmra.mrb[0].mxu0 %v69
  %v265 = vpop.f32.mrb[0].mxu0
  %v266 = vadd.f32 0.0, %v265
  %v267 = vpop.f32.mrb[0].mxu0
  %v268 = vpop.f32.mrb[0].mxu0
  %v269 = vpop.f32.mrb[0].mxu0
  %270 = vdwg.mxu0
  %271 = vmatprep.subr.bf16.mxu0 0
  %272 = vmatpush1.bf16.msra.mxu0 %v190
  %273 = vmatprep.subr.bf16.mxu0 0
  %274 = vmatpush1.bf16.msra.mxu0 %v191
  %275 = vmatprep.subr.bf16.mxu0 0
  %276 = vmatpush1.bf16.msra.mxu0 %v192
  %277 = vmatprep.subr.bf16.mxu0 0
  %278 = vmatpush1.bf16.msra.mxu0 %v193
  %279 = vmatprep.subr.bf16.mxu0 0
  %280 = vmatpush1.bf16.msra.mxu0 %v194
  %281 = vmatprep.subr.bf16.mxu0 0
  %282 = vmatpush1.bf16.msra.mxu0 %v195
  %283 = vmatprep.subr.bf16.mxu0 0
  %284 = vmatpush1.bf16.msra.mxu0 %v196
  %285 = vmatprep.subr.bf16.mxu0 0
  %286 = vmatpush1.bf16.msra.mxu0 %v197
  %287 = vmatprep.subr.bf16.mxu0 0
  %288 = vmatpush1.bf16.msra.mxu0 %v229
  %289 = vmatprep.subr.bf16.mxu0 0
  %290 = vmatpush1.bf16.msra.mxu0 0
  %291 = vmatprep.subr.bf16.mxu0 0
  %292 = vmatpush1.bf16.msra.mxu0 0
  %293 = vmatprep.subr.bf16.mxu0 0
  %294 = vmatpush1.bf16.msra.mxu0 0
  %295 = vmatprep.subr.bf16.mxu0 0
  %296 = vmatpush1.bf16.msra.mxu0 0
  %297 = vmatprep.subr.bf16.mxu0 0
  %298 = vmatpush1.bf16.msra.mxu0 0
  %299 = vmatprep.subr.bf16.mxu0 0
  %300 = vmatpush1.bf16.msra.mxu0 0
  %301 = vmatprep.subr.bf16.mxu0 0
  %302 = vmatpush1.bf16.msra.mxu0 0
  %303 = vmatprep.mubr.bf16.mxu0 %v225
  %304 = vmatmul.mubr.bf16.gmra.mrb[0].mxu0 %v71
  %v305 = vpop.f32.mrb[0].mxu0
  %v306 = vadd.f32 %v266, %v305
  %v307 = vpop.f32.mrb[0].mxu0
  %v308 = vpop.f32.mrb[0].mxu0
  %v309 = vpop.f32.mrb[0].mxu0
  %310 = vdwg.mxu0
  %311 = vst [vmem:[%s2] sm:$0xff] %v306
  // Predicated region
  $region10: #{_imder_forward.3} parent=0 // pred_check
    _
  $region11: #{_imder_forward.3} parent=0 // pred_check_branch
    %313 = sbr.rel (0) target = $region13
  $region12: #{_imder_forward.3} parent=0 // pred_region
    _
  $region13: #{_imder_forward.3} parent=0 // pred_fallthru
    _
  // Predicated region
  $region14: #{_imder_forward.3} parent=0 // pred_check
    _
  $region15: #{_imder_forward.3} parent=0 // pred_check_branch
    %315 = sbr.rel (0) target = $region17
  $region16: #{_imder_forward.3} parent=0 // pred_region
    _
  $region17: #{_imder_forward.3} parent=0 // pred_fallthru
    _

</llo_original>
